<compile_context>
chip_gen: v6e
topology: v6e:2x2x1
jax: 0.10.0
libtpu: 0.0.40
codegen_flags: <defaults>
</compile_context>

<pallas_src>
import functools

import jax
import jax.numpy as jnp
from jax.experimental import pallas as pl
from jax.experimental.pallas import tpu as pltpu


# --------------------------------------------------------------------------
# Kernel
# --------------------------------------------------------------------------
def _rope_kernel(start_blk_ref, cos_ref, sin_ref, xq_ref, xk_ref, oq_ref, ok_ref):
    # start_blk_ref: (1,) int32 scalar-prefetch value, consumed only by the
    # table index_map (folds the static `start` offset into the table fetch).
    del start_blk_ref
    # cos/sin: (TS, D) lane-interleaved tables (serving dtype).
    # xq/xk/oq/ok: (TS, D) tiles (batch dim squeezed by the BlockSpec).
    cos = cos_ref[...].astype(jnp.float32)
    sin = sin_ref[...].astype(jnp.float32)
    d = cos.shape[-1]

    # Single-row even/odd lane mask; jnp.where broadcasts it over sublanes so
    # we don't burn full-tile VALU ops on iota/mod/cmp every grid step.
    lane = jax.lax.broadcasted_iota(jnp.int32, (1, d), dimension=1)
    is_even = (lane % 2) == 0

    def rotate(x_ref, o_ref):
        # Compute in f32 (free: kernel is memory-bound), cast only at the store.
        x = x_ref[...].astype(jnp.float32)
        # swap_adjacent(x)[2j] = x[2j+1]; swap_adjacent(x)[2j+1] = x[2j].
        # NOTE: the roll wraparound lanes (0 and d-1) carry wrong values but
        # are always discarded by the even/odd select below.  If the select is
        # ever removed or the D axis is tiled, this silently breaks -- keep the
        # rolls and the select together.
        right = pltpu.roll(x, shift=d - 1, axis=1)   # y[l] = x[(l + 1) % d]
        left = pltpu.roll(x, shift=1, axis=1)        # y[l] = x[(l - 1) % d]
        x_sw = jnp.where(is_even, right, left)
        o_ref[...] = (x * cos + x_sw * sin).astype(o_ref.dtype)

    rotate(xq_ref, oq_ref)
    rotate(xk_ref, ok_ref)


# --------------------------------------------------------------------------
# Tiling / VMEM sizing helpers
# --------------------------------------------------------------------------
def _vmem_capacity_bytes():
    """Physical VMEM per TensorCore, with a conservative fallback."""
    try:
        info = pltpu.get_tpu_info()
        cap = getattr(info, "vmem_capacity_bytes", None)
        if cap:
            return int(cap)
    except Exception:
        pass
    return 64 * 1024 * 1024  # v7x-sized fallback (smallest current part)


def _per_row_bytes(D, itemsize):
    # 6 refs (cos, sin, xq, xk, oq, ok) x 2 pipeline buffers in serving dtype,
    # plus ~6 f32 tile-sized in-kernel temporaries (upcasts, rolls, swap, prod).
    return 6 * 2 * D * itemsize + 6 * D * 4


def _vmem_limit_bytes(tile_rows, D, itemsize):
    cap = _vmem_capacity_bytes()
    footprint = tile_rows * _per_row_bytes(D, itemsize) + (4 << 20)  # + margin
    hi = min(int(cap * 0.75), 96 * 1024 * 1024)
    return int(min(max(footprint, 16 * 1024 * 1024), hi))


def _choose_tile_rows(B, S, D, itemsize):
    """Seq-tile row count sized from the real per-step VMEM footprint."""
    cap = _vmem_capacity_bytes()
    # ~45% of physical VMEM: ~28 MiB on v7x (64 MiB), capped at 56 MiB on
    # 128 MiB parts (gains flatten past a few MiB per ref anyway).
    budget = min(int(cap * 0.45), 56 * 1024 * 1024)
    rows = budget // max(_per_row_bytes(D, itemsize), 1)
    rows = max(16, (rows // 16) * 16)  # sublane-friendly for f32 and bf16
    if rows >= S:
        rows = S
    # v7x megacore: when B == 1 make sure the (parallel) seq axis has >= 2
    # steps so both TensorCores get work; keep >= 512 rows per tile to
    # amortize the ~0.35us per-step overhead (no-op on single-TC v5e/v6e).
    if B == 1 and S >= 1024:
        half = ((-(-S // 2)) + 15) // 16 * 16
        rows = min(rows, max(half, 512))
    return int(rows)


# --------------------------------------------------------------------------
# pallas_call wrapper
# --------------------------------------------------------------------------
@functools.partial(jax.jit, static_argnames=("tile_rows", "vmem_limit"))
def _rope_pallas(start_blk, xq, xk, cos_tab, sin_tab, *, tile_rows, vmem_limit):
    B, S, D = xq.shape
    ts = tile_rows
    n_s = pl.cdiv(S, ts)

    # Batch dim squeezed out of the kernel refs -> kernel sees (ts, D) tiles.
    x_spec = pl.BlockSpec((None, ts, D), lambda s, b, sb: (b, s, 0))
    # Table blocks offset by the scalar-prefetched start block (dynamic, so no
    # recompilation across different `start` values).
    f_spec = pl.BlockSpec((ts, D), lambda s, b, sb: (sb[0] + s, 0))

    oq, ok = pl.pallas_call(
        _rope_kernel,
        out_shape=(jax.ShapeDtypeStruct((B, S, D), xq.dtype),
                   jax.ShapeDtypeStruct((B, S, D), xk.dtype)),
        grid_spec=pltpu.PrefetchScalarGridSpec(
            num_scalar_prefetch=1,
            grid=(n_s, B),              # batch fastest -> table tile reused
            in_specs=[f_spec, f_spec, x_spec, x_spec],
            out_specs=[x_spec, x_spec],
        ),
        compiler_params=pltpu.CompilerParams(
            dimension_semantics=("parallel", "parallel"),
            vmem_limit_bytes=vmem_limit,
        ),
        # TODO(synk): add input_output_aliases (xq->oq, xk->ok) for in-place
        # RoPE once callers no longer need the pre-rotation xq/xk (the PyTorch
        # module returns clones, so we keep separate outputs here).
    )(start_blk, cos_tab, sin_tab, xq, xk)
    return oq, ok


# --------------------------------------------------------------------------
# Module
# --------------------------------------------------------------------------
class RotaryEmbedding:
    """JAX/Pallas port of the PyTorch RotaryEmbedding module (forward only)."""

    def __init__(self, embed_dim: int, max_positions: int = 10000,
                 base: float = 10000.0):
        if embed_dim % 2 != 0:
            raise ValueError("The embedding dimension must be divisible by 2.")
        self.embed_dim = embed_dim
        self.max_positions = max_positions
        self.base = base
        # Lane-interleaved tables of width embed_dim (f32 master copies):
        #   cos_full[p]   = [c0, c0, c1, c1, ...]
        #   sin_signed[p] = [-s0, +s0, -s1, +s1, ...]
        position = jnp.arange(max_positions, dtype=jnp.float32)[:, None]
        div_term = jnp.exp(
            jnp.arange(0, embed_dim, 2, dtype=jnp.float32)
            * (-jnp.log(jnp.float32(base)) / embed_dim))
        freqs = position * div_term[None, :]                     # (P, D/2)
        cos = jnp.cos(freqs)
        sin = jnp.sin(freqs)
        self._cos_full_f32 = jnp.repeat(cos, 2, axis=-1)         # (P, D)
        self._sin_signed_f32 = jnp.stack([-sin, sin], axis=-1).reshape(
            max_positions, embed_dim)                            # (P, D)
        self._table_cache = {}                                   # dtype -> tables

    def _tables(self, dtype):
        """Full-length tables cast to the serving dtype, cached (no per-call cast)."""
        key = jnp.dtype(dtype).name
        if key not in self._table_cache:
            self._table_cache[key] = (
                self._cos_full_f32.astype(dtype),
                self._sin_signed_f32.astype(dtype),
            )
        return self._table_cache[key]

    def __call__(self, xq, xk, start: int, *, tile_rows=None):
        B, S, D = xq.shape
        assert D == self.embed_dim
        # NOTE: `start` must be a Python int, same as the PyTorch module usage.
        end = start + S
        assert end <= self.max_positions, (
            f"Sequence length too long, exceeds max positions: "
            f"{end} > {self.max_positions}")

        itemsize = jnp.dtype(xq.dtype).itemsize
        if tile_rows is None:
            tile_rows = _choose_tile_rows(B, S, D, itemsize)
        vmem_limit = _vmem_limit_bytes(tile_rows, D, itemsize)

        cos_full, sin_full = self._tables(xq.dtype)

        # Fast path: start is tile-aligned and the tile is sublane-aligned ->
        # stream tiles straight out of the full (P, D) tables, zero copies.
        if tile_rows % 8 == 0 and start % tile_rows == 0:
            start_blk = jnp.asarray([start // tile_rows], dtype=jnp.int32)
            cos_tab, sin_tab = cos_full, sin_full
        else:
            # Unaligned / tiny-tile fallback: slice the cached (already
            # dtype-cast) tables once; no astype materialization either way.
            start_blk = jnp.zeros((1,), dtype=jnp.int32)
            cos_tab = jax.lax.dynamic_slice_in_dim(cos_full, start, S, axis=0)
            sin_tab = jax.lax.dynamic_slice_in_dim(sin_full, start, S, axis=0)

        return _rope_pallas(start_blk, xq, xk, cos_tab, sin_tab,
                            tile_rows=tile_rows, vmem_limit=vmem_limit)


# --------------------------------------------------------------------------
# Pure-JAX reference + self-test
# --------------------------------------------------------------------------
def _rope_reference(xq, xk, cos, sin):
    """Matches PyTorch apply_rotary_emb (a=cos, b=sin); cos/sin are (S, D//2)."""
    B, S, D = xq.shape
    H = D // 2
    c = cos[None]
    s = sin[None]

    def rot(x):
        x4 = x.reshape(B, S, H, 2)
        xe, xo = x4[..., 0], x4[..., 1]
        return jnp.stack([xe * c - xo * s, xe * s + xo * c],
                         axis=-1).reshape(B, S, D)

    return rot(xq), rot(xk)


def _half_tables(max_positions, D, base=10000.0):
    position = jnp.arange(max_positions, dtype=jnp.float32)[:, None]
    div_term = jnp.exp(jnp.arange(0, D, 2, dtype=jnp.float32)
                       * (-jnp.log(jnp.float32(base)) / D))
    freqs = position * div_term[None, :]
    return jnp.cos(freqs), jnp.sin(freqs)


if __name__ == "__main__":
    # Test 1: small f32, B > 1, unaligned start -> sliced-table fallback path.
    B, S, D = 2, 8, 128
    start = 3
    max_positions = 64

    key = jax.random.PRNGKey(0)
    kq, kk = jax.random.split(key)
    xq = jax.random.normal(kq, (B, S, D), dtype=jnp.float32)
    xk = jax.random.normal(kk, (B, S, D), dtype=jnp.float32)

    rope = RotaryEmbedding(embed_dim=D, max_positions=max_positions)
    xq_out, xk_out = rope(xq, xk, start)
    jax.block_until_ready((xq_out, xk_out))

    cos_h, sin_h = _half_tables(max_positions, D)
    xq_ref, xk_ref = _rope_reference(xq, xk, cos_h[start:start + S],
                                     sin_h[start:start + S])
    assert jnp.allclose(xq_out, xq_ref, atol=1e-5, rtol=1e-5)
    assert jnp.allclose(xk_out, xk_ref, atol=1e-5, rtol=1e-5)

    # Test 2: seq-tiling grid (3 tiles, last partial), aligned full-table path.
    B2, S2, D2 = 1, 40, 256
    kq2, kk2 = jax.random.split(jax.random.PRNGKey(1))
    xq2 = jax.random.normal(kq2, (B2, S2, D2), dtype=jnp.float32)
    xk2 = jax.random.normal(kk2, (B2, S2, D2), dtype=jnp.float32)

    rope2 = RotaryEmbedding(embed_dim=D2, max_positions=64)
    xq2_out, xk2_out = rope2(xq2, xk2, 0, tile_rows=16)
    jax.block_until_ready((xq2_out, xk2_out))

    cos2_h, sin2_h = _half_tables(64, D2)
    xq2_ref, xk2_ref = _rope_reference(xq2, xk2, cos2_h[:S2], sin2_h[:S2])
    assert jnp.allclose(xq2_out, xq2_ref, atol=1e-5, rtol=1e-5)
    assert jnp.allclose(xk2_out, xk2_ref, atol=1e-5, rtol=1e-5)

    # Test 3: bf16 activations, B == 1, nonzero aligned start -> full-table
    # zero-copy path with f32 in-kernel compute.
    B3, S3, D3 = 1, 32, 128
    start3 = 32
    kq3, kk3 = jax.random.split(jax.random.PRNGKey(2))
    xq3 = jax.random.normal(kq3, (B3, S3, D3), dtype=jnp.bfloat16)
    xk3 = jax.random.normal(kk3, (B3, S3, D3), dtype=jnp.bfloat16)

    rope3 = RotaryEmbedding(embed_dim=D3, max_positions=128)
    xq3_out, xk3_out = rope3(xq3, xk3, start3)
    jax.block_until_ready((xq3_out, xk3_out))

    cos3_h, sin3_h = _half_tables(128, D3)
    xq3_ref, xk3_ref = _rope_reference(xq3.astype(jnp.float32),
                                       xk3.astype(jnp.float32),
                                       cos3_h[start3:start3 + S3],
                                       sin3_h[start3:start3 + S3])
    assert jnp.allclose(xq3_out.astype(jnp.float32), xq3_ref, atol=8e-2, rtol=8e-2)
    assert jnp.allclose(xk3_out.astype(jnp.float32), xk3_ref, atol=8e-2, rtol=8e-2)

    print("KERNEL_OK")
</pallas_src>

<mosaic_0001>
module attributes {stable_mosaic.version = 11 : i64} {
  func.func @_rope_kernel(%arg0: i32, %arg1: i32, %arg2: memref<1xi32, #tpu.memory_space<smem>>, %arg3: memref<8x128xf32, #tpu.memory_space<vmem>>, %arg4: memref<8x128xf32, #tpu.memory_space<vmem>>, %arg5: memref<1x8x128xf32, #tpu.memory_space<vmem>>, %arg6: memref<1x8x128xf32, #tpu.memory_space<vmem>>, %arg7: memref<1x8x128xf32, #tpu.memory_space<vmem>>, %arg8: memref<1x8x128xf32, #tpu.memory_space<vmem>>) attributes {dimension_semantics = [#tpu.dimension_semantics<parallel>, #tpu.dimension_semantics<parallel>], iteration_bounds = array<i64: 1, 2>, scalar_prefetch = 1 : i64, scratch_operands = 0 : i64, tpu.core_type = #tpu.core_type<tc>, window_params = [{transform_indices = @transform_0, window_bounds = array<i64: 8, 128>}, {transform_indices = @transform_1, window_bounds = array<i64: 8, 128>}, {transform_indices = @transform_2, window_bounds = array<i64: 1, 8, 128>}, {transform_indices = @transform_3, window_bounds = array<i64: 1, 8, 128>}, {transform_indices = @transform_4, window_bounds = array<i64: 1, 8, 128>}, {transform_indices = @transform_5, window_bounds = array<i64: 1, 8, 128>}]} {
    %c0 = arith.constant 0 : index
    %c0_0 = arith.constant 0 : index
    %0 = vector.load %arg3[%c0, %c0_0] : memref<8x128xf32, #tpu.memory_space<vmem>>, vector<8x128xf32>
    %c0_1 = arith.constant 0 : index
    %c0_2 = arith.constant 0 : index
    %1 = vector.load %arg4[%c0_1, %c0_2] : memref<8x128xf32, #tpu.memory_space<vmem>>, vector<8x128xf32>
    %2 = tpu.iota {dimensions = array<i32: 1>} : vector<1x128xi32>
    %c2_i32 = arith.constant 2 : i32
    %c0_i32 = arith.constant 0 : i32
    %3 = arith.cmpi eq, %c2_i32, %c0_i32 : i32
    %c1_i32 = arith.constant 1 : i32
    %4 = arith.select %3, %c1_i32, %c2_i32 : i32
    %5 = vector.broadcast %4 : i32 to vector<1x128xi32>
    %6 = arith.remsi %2, %5 : vector<1x128xi32>
    %c0_i32_3 = arith.constant 0 : i32
    %7 = vector.broadcast %c0_i32_3 : i32 to vector<1x128xi32>
    %8 = arith.cmpi ne, %6, %7 : vector<1x128xi32>
    %c0_i32_4 = arith.constant 0 : i32
    %9 = vector.broadcast %c0_i32_4 : i32 to vector<1x128xi32>
    %10 = arith.cmpi slt, %6, %9 : vector<1x128xi32>
    %c0_i32_5 = arith.constant 0 : i32
    %11 = arith.cmpi slt, %4, %c0_i32_5 : i32
    %12 = vector.broadcast %11 : i1 to vector<1x128xi1>
    %13 = vector.broadcast %12 : vector<1x128xi1> to vector<1x128xi1>
    %14 = arith.xori %10, %13 : vector<1x128xi1>
    %15 = arith.andi %14, %8 : vector<1x128xi1>
    %16 = vector.broadcast %4 : i32 to vector<1x128xi32>
    %17 = arith.addi %6, %16 : vector<1x128xi32>
    %18 = arith.select %15, %17, %6 : vector<1x128xi1>, vector<1x128xi32>
    %c0_i32_6 = arith.constant 0 : i32
    %19 = vector.broadcast %c0_i32_6 : i32 to vector<1x128xi32>
    %20 = arith.cmpi eq, %18, %19 : vector<1x128xi32>
    %c0_7 = arith.constant 0 : index
    %c0_8 = arith.constant 0 : index
    %c0_9 = arith.constant 0 : index
    %21 = vector.load %arg5[%c0_7, %c0_8, %c0_9] : memref<1x8x128xf32, #tpu.memory_space<vmem>>, vector<1x8x128xf32>
    %22 = vector.shape_cast %21 : vector<1x8x128xf32> to vector<8x128xf32>
    %c127_i32 = arith.constant 127 : i32
    %23 = tpu.dynamic_rotate %22 by %c127_i32 dim 1 : vector<8x128xf32>, i32 -> vector<8x128xf32>
    %c1_i32_10 = arith.constant 1 : i32
    %24 = tpu.dynamic_rotate %22 by %c1_i32_10 dim 1 : vector<8x128xf32>, i32 -> vector<8x128xf32>
    %25 = vector.shape_cast %20 : vector<1x128xi1> to vector<1x128xi1>
    %26 = vector.broadcast %25 : vector<1x128xi1> to vector<8x128xi1>
    %27 = arith.select %26, %23, %24 : vector<8x128xi1>, vector<8x128xf32>
    %28 = arith.mulf %22, %0 : vector<8x128xf32>
    %29 = arith.mulf %27, %1 : vector<8x128xf32>
    %30 = arith.addf %28, %29 : vector<8x128xf32>
    %c0_11 = arith.constant 0 : index
    %c0_12 = arith.constant 0 : index
    %c0_13 = arith.constant 0 : index
    %31 = vector.load %arg7[%c0_11, %c0_12, %c0_13] : memref<1x8x128xf32, #tpu.memory_space<vmem>>, vector<1x8x128xf32>
    %32 = vector.shape_cast %31 : vector<1x8x128xf32> to vector<8x128xf32>
    %33 = vector.shape_cast %30 : vector<8x128xf32> to vector<1x8x128xf32>
    tpu.vector_store %arg7[%c0_11, %c0_12, %c0_13], %33 {strides = array<i32>} : memref<1x8x128xf32, #tpu.memory_space<vmem>>, vector<1x8x128xf32>,
    %c0_14 = arith.constant 0 : index
    %c0_15 = arith.constant 0 : index
    %c0_16 = arith.constant 0 : index
    %34 = vector.load %arg6[%c0_14, %c0_15, %c0_16] : memref<1x8x128xf32, #tpu.memory_space<vmem>>, vector<1x8x128xf32>
    %35 = vector.shape_cast %34 : vector<1x8x128xf32> to vector<8x128xf32>
    %c127_i32_17 = arith.constant 127 : i32
    %36 = tpu.dynamic_rotate %35 by %c127_i32_17 dim 1 : vector<8x128xf32>, i32 -> vector<8x128xf32>
    %c1_i32_18 = arith.constant 1 : i32
    %37 = tpu.dynamic_rotate %35 by %c1_i32_18 dim 1 : vector<8x128xf32>, i32 -> vector<8x128xf32>
    %38 = vector.shape_cast %20 : vector<1x128xi1> to vector<1x128xi1>
    %39 = vector.broadcast %38 : vector<1x128xi1> to vector<8x128xi1>
    %40 = arith.select %39, %36, %37 : vector<8x128xi1>, vector<8x128xf32>
    %41 = arith.mulf %35, %0 : vector<8x128xf32>
    %42 = arith.mulf %40, %1 : vector<8x128xf32>
    %43 = arith.addf %41, %42 : vector<8x128xf32>
    %c0_19 = arith.constant 0 : index
    %c0_20 = arith.constant 0 : index
    %c0_21 = arith.constant 0 : index
    %44 = vector.load %arg8[%c0_19, %c0_20, %c0_21] : memref<1x8x128xf32, #tpu.memory_space<vmem>>, vector<1x8x128xf32>
    %45 = vector.shape_cast %44 : vector<1x8x128xf32> to vector<8x128xf32>
    %46 = vector.shape_cast %43 : vector<8x128xf32> to vector<1x8x128xf32>
    tpu.vector_store %arg8[%c0_19, %c0_20, %c0_21], %46 {strides = array<i32>} : memref<1x8x128xf32, #tpu.memory_space<vmem>>, vector<1x8x128xf32>,
    return
  }
  func.func @transform_0(%arg0: i32, %arg1: i32, %arg2: memref<1xi32, #tpu.memory_space<smem>>) -> (i32, i32) {
    %c0 = arith.constant 0 : index
    %0 = memref.load %arg2[%c0] : memref<1xi32, #tpu.memory_space<smem>>
    %1 = arith.addi %0, %arg0 : i32
    %c0_i32 = arith.constant 0 : i32
    %c0_i32_0 = arith.constant 0 : i32
    return %1, %c0_i32 : i32, i32
  }
  func.func @transform_1(%arg0: i32, %arg1: i32, %arg2: memref<1xi32, #tpu.memory_space<smem>>) -> (i32, i32) {
    %c0 = arith.constant 0 : index
    %0 = memref.load %arg2[%c0] : memref<1xi32, #tpu.memory_space<smem>>
    %1 = arith.addi %0, %arg0 : i32
    %c0_i32 = arith.constant 0 : i32
    %c0_i32_0 = arith.constant 0 : i32
    return %1, %c0_i32 : i32, i32
  }
  func.func @transform_2(%arg0: i32, %arg1: i32, %arg2: memref<1xi32, #tpu.memory_space<smem>>) -> (i32, i32, i32) {
    %c0_i32 = arith.constant 0 : i32
    %c0_i32_0 = arith.constant 0 : i32
    return %arg1, %arg0, %c0_i32 : i32, i32, i32
  }
  func.func @transform_3(%arg0: i32, %arg1: i32, %arg2: memref<1xi32, #tpu.memory_space<smem>>) -> (i32, i32, i32) {
    %c0_i32 = arith.constant 0 : i32
    %c0_i32_0 = arith.constant 0 : i32
    return %arg1, %arg0, %c0_i32 : i32, i32, i32
  }
  func.func @transform_4(%arg0: i32, %arg1: i32, %arg2: memref<1xi32, #tpu.memory_space<smem>>) -> (i32, i32, i32) {
    %c0_i32 = arith.constant 0 : i32
    %c0_i32_0 = arith.constant 0 : i32
    return %arg1, %arg0, %c0_i32 : i32, i32, i32
  }
  func.func @transform_5(%arg0: i32, %arg1: i32, %arg2: memref<1xi32, #tpu.memory_space<smem>>) -> (i32, i32, i32) {
    %c0_i32 = arith.constant 0 : i32
    %c0_i32_0 = arith.constant 0 : i32
    return %arg1, %arg0, %c0_i32 : i32, i32, i32
  }
}

</mosaic_0001>

<llo_original>
// kernel: _rope_pallas.1
$region0: #{_rope_pallas.1}
  #allocation0 [shape = 'u32[]', space=smem, size = 0x4, offset = 0x4, fixed_abs, tag = 'smem constant byte address 0x4 - core index']
  #allocation1 [shape = 'u32[144,128]{1,0:T(1,128)}', space=vmem, size = 0x12000, scoped, tag = 'internal scratch']
  #allocation2 [shape = 's32[1]{0}', space=sflag, size = 0x4, scoped, tag = 'scoped memory for _rope_pallas.1']
  #allocation3 [shape = 's32[1]{0:T(128)S(6)}', space=smem, size = 0x200, scoped, tag = 'prefetched SMEM operand 0']
  %s0 = inlined_call_operand.<no memory space> [shape: s32[1], index: 0, kind: input, shape index: {}]
  %s1 = inlined_call_operand.hbm [shape: f32[8,128], index: 1, kind: input, shape index: {}]
  %s2 = inlined_call_operand.hbm [shape: f32[8,128], index: 2, kind: input, shape index: {}]
  %s3 = inlined_call_operand.hbm [shape: f32[2,8,128], index: 3, kind: input, shape index: {}]
  %s4 = inlined_call_operand.hbm [shape: f32[2,8,128], index: 4, kind: input, shape index: {}]
  %s5 = inlined_call_operand.hbm [shape: f32[2,8,128], index: 5, kind: output, shape index: {0}]
  %s6 = inlined_call_operand.hbm [shape: f32[2,8,128], index: 6, kind: output, shape index: {1}]
  %7 = xla_tuple %s5, %s6
  %s8 = sld [smem:[#allocation0]]
  $region73: #{_rope_pallas.1} parent=0
    _
  %s10 = ssub.s32 1, %s8
  %s11 = scalar_select 0, %s10, %s8
  %12 = sst [smem:[#allocation3]] %s0
  $region1: #{_rope_pallas.1} parent=0
    #allocation4 [shape = 'u8[4096]{0}', space=vmem, size = 0x1000, scoped, tag = 'input window, operand 1, single buffered']
    #allocation5 [shape = 's32[2]{0}', space=sflag, size = 0x8, scoped, tag = 'scoped memory for _rope_pallas.1']
    #allocation6 [shape = 's32[2]{0}', space=sflag, size = 0x8, scoped, tag = 'scoped memory for _rope_pallas.1']
    #allocation7 [shape = 'u8[4096]{0}', space=vmem, size = 0x1000, scoped, tag = 'input window, operand 2, single buffered']
    #allocation8 [shape = 's32[1]{0}', space=sflag, size = 0x4, scoped, tag = 'scoped memory for _rope_pallas.1']
    #allocation9 [shape = 'u8[8192]{0}', space=vmem, size = 0x2000, scoped, tag = 'input window, operand 3']
    #allocation10 [shape = 'u8[8192]{0}', space=vmem, size = 0x2000, scoped, tag = 'input window, operand 4']
    #allocation11 [shape = 'u8[8192]{0}', space=vmem, size = 0x2000, scoped, tag = 'output window, operand 0']
    #allocation12 [shape = 'u8[8192]{0}', space=vmem, size = 0x2000, scoped, tag = 'output window, operand 1']
    #allocation13 [shape = 's32[2]{0}', space=sflag, size = 0x8, scoped, tag = 'scoped memory for _rope_pallas.1']
    %13 = vsyncpa [#allocation5], 0
    %14 = vsyncpa [#allocation8], 0
    %15 = vsyncpa [#allocation6], 0
    %s16 = scalar_lea.sflag [#allocation6], 1
    %17 = vsyncpa %s16, 0
    %18 = vsyncpa [#allocation13], 0
    %s19 = scalar_lea.sflag [#allocation13], 1
    %20 = vsyncpa %s19, 0
    loop: start=0, step=1, limit=4
    $region2: #{_rope_pallas.1} parent=1 // loop_pre_header
      _
    $region3: #{_rope_pallas.1} parent=1 // loop_header
      %s22 = sphi 0, %s26
      %p23 = scmp.ge.s32.totalorder %s22, 4
      %s29 = sphi 0, %s41
      %s30 = sphi 0, %s37
      %s31 = sphi 0, %s29
      %s32 = sphi 0, %s30
      %s33 = sphi 0, %s31
      %s34 = sphi 0, %s32
      %s48 = sphi 0, %s50
      %s51 = sphi 0, %s48
      %s52 = sphi 0, %s51
      %s68 = sphi 0, %s52
      %s78 = sphi 0, %s80
      %s81 = sphi 0, %s78
      %s82 = sphi 0, %s81
      %s98 = sphi 0, %s82
      %s106 = sphi 0, %s108
      %s109 = sphi 0, %s106
      %s110 = sphi 0, %s109
      %s126 = sphi 0, %s110
      %s134 = sphi 0, %s136
      %s137 = sphi 0, %s134
      %s138 = sphi 0, %s137
      %s154 = sphi 0, %s138
      %s162 = sphi 0, %s164
      %s165 = sphi 0, %s162
      %s166 = sphi 0, %s165
      %s182 = sphi 0, %s166
      %s190 = sphi 0, %s192
      %s193 = sphi 0, %s190
      %s194 = sphi 0, %s193
      %s210 = sphi 0, %s194
    $region4: #{_rope_pallas.1} parent=1 // loop_header_branch
      %25 = sbr.rel (%p23) target = $region8
    $region5: #{_rope_pallas.1} parent=1 // loop_body
      %s27 = ssub.s32 %s22, 1
      %s28 = ssub.s32 %s22, 2
      %s35 = sadd.s32 1, %s30
      %p36 = scmp.ge.s32.totalorder %s35, 2
      %s37 = scalar_select %p36, 0, %s35
      %s38 = sadd.s32 1, %s29
      %s39 = scalar_select %p36, %s38, %s29
      %p40 = scmp.ge.s32.totalorder %s39, 1
      %s41 = scalar_select %p40, 0, %s39
      %s42 = sld [smem:[#allocation3]]
      %s43 = sadd.s32 %s42, %s29
      %s44 = sld [smem:[#allocation3]]
      %s45 = sadd.s32 %s44, %s41
      %s46 = ssub.s32 %s43, %s45
      %p47 = scmp.eq.s32.totalorder %s46, 0
      %s49 = sadd.s32 %s48, 1
      %s50 = scalar_select %p47, %s48, %s49
      %p53 = pneg %p47
      %p54 = scmp.eq.s32.totalorder %s22, 1
      %p55 = por %p53, %p54
      %p56 = scmp.ne.s32.totalorder %s48, %s51
      %p57 = scmp.eq.s32.totalorder %s22, 0
      %p58 = por %p56, %p57
      %p59 = scmp.ne.s32.totalorder %s48, %s51
      %p60 = scmp.eq.s32.totalorder %s27, 1
      %p61 = por %p59, %p60
      %p62 = scmp.ne.s32.totalorder %s51, %s52
      %p63 = scmp.eq.s32.totalorder %s27, 0
      %p64 = por %p62, %p63
      %p65 = scmp.ne.s32.totalorder %s51, %s52
      %p66 = scmp.eq.s32.totalorder %s28, 1
      %p67 = por %p65, %p66
      %p69 = scmp.ne.s32.totalorder %s52, %s68
      %p70 = scmp.eq.s32.totalorder %s28, 0
      %p71 = por %p69, %p70
      %s72 = sld [smem:[#allocation3]]
      %s73 = sadd.s32 %s72, %s29
      %s74 = sld [smem:[#allocation3]]
      %s75 = sadd.s32 %s74, %s41
      %s76 = ssub.s32 %s73, %s75
      %p77 = scmp.eq.s32.totalorder %s76, 0
      %s79 = sadd.s32 %s78, 1
      %s80 = scalar_select %p77, %s78, %s79
      %p83 = pneg %p77
      %p84 = scmp.eq.s32.totalorder %s22, 1
      %p85 = por %p83, %p84
      %p86 = scmp.ne.s32.totalorder %s78, %s81
      %p87 = scmp.eq.s32.totalorder %s22, 0
      %p88 = por %p86, %p87
      %p89 = scmp.ne.s32.totalorder %s78, %s81
      %p90 = scmp.eq.s32.totalorder %s27, 1
      %p91 = por %p89, %p90
      %p92 = scmp.ne.s32.totalorder %s81, %s82
      %p93 = scmp.eq.s32.totalorder %s27, 0
      %p94 = por %p92, %p93
      %p95 = scmp.ne.s32.totalorder %s81, %s82
      %p96 = scmp.eq.s32.totalorder %s28, 1
      %p97 = por %p95, %p96
      %p99 = scmp.ne.s32.totalorder %s82, %s98
      %p100 = scmp.eq.s32.totalorder %s28, 0
      %p101 = por %p99, %p100
      %s102 = ssub.s32 %s30, %s37
      %s103 = ssub.s32 %s29, %s41
      %s104 = sor.u32 %s102, %s103
      %p105 = scmp.eq.s32.totalorder %s104, 0
      %s107 = sadd.s32 %s106, 1
      %s108 = scalar_select %p105, %s106, %s107
      %p111 = pneg %p105
      %p112 = scmp.eq.s32.totalorder %s22, 1
      %p113 = por %p111, %p112
      %p114 = scmp.ne.s32.totalorder %s106, %s109
      %p115 = scmp.eq.s32.totalorder %s22, 0
      %p116 = por %p114, %p115
      %p117 = scmp.ne.s32.totalorder %s106, %s109
      %p118 = scmp.eq.s32.totalorder %s27, 1
      %p119 = por %p117, %p118
      %p120 = scmp.ne.s32.totalorder %s109, %s110
      %p121 = scmp.eq.s32.totalorder %s27, 0
      %p122 = por %p120, %p121
      %p123 = scmp.ne.s32.totalorder %s109, %s110
      %p124 = scmp.eq.s32.totalorder %s28, 1
      %p125 = por %p123, %p124
      %p127 = scmp.ne.s32.totalorder %s110, %s126
      %p128 = scmp.eq.s32.totalorder %s28, 0
      %p129 = por %p127, %p128
      %s130 = ssub.s32 %s30, %s37
      %s131 = ssub.s32 %s29, %s41
      %s132 = sor.u32 %s130, %s131
      %p133 = scmp.eq.s32.totalorder %s132, 0
      %s135 = sadd.s32 %s134, 1
      %s136 = scalar_select %p133, %s134, %s135
      %p139 = pneg %p133
      %p140 = scmp.eq.s32.totalorder %s22, 1
      %p141 = por %p139, %p140
      %p142 = scmp.ne.s32.totalorder %s134, %s137
      %p143 = scmp.eq.s32.totalorder %s22, 0
      %p144 = por %p142, %p143
      %p145 = scmp.ne.s32.totalorder %s134, %s137
      %p146 = scmp.eq.s32.totalorder %s27, 1
      %p147 = por %p145, %p146
      %p148 = scmp.ne.s32.totalorder %s137, %s138
      %p149 = scmp.eq.s32.totalorder %s27, 0
      %p150 = por %p148, %p149
      %p151 = scmp.ne.s32.totalorder %s137, %s138
      %p152 = scmp.eq.s32.totalorder %s28, 1
      %p153 = por %p151, %p152
      %p155 = scmp.ne.s32.totalorder %s138, %s154
      %p156 = scmp.eq.s32.totalorder %s28, 0
      %p157 = por %p155, %p156
      %s158 = ssub.s32 %s30, %s37
      %s159 = ssub.s32 %s29, %s41
      %s160 = sor.u32 %s158, %s159
      %p161 = scmp.eq.s32.totalorder %s160, 0
      %s163 = sadd.s32 %s162, 1
      %s164 = scalar_select %p161, %s162, %s163
      %p167 = pneg %p161
      %p168 = scmp.eq.s32.totalorder %s22, 1
      %p169 = por %p167, %p168
      %p170 = scmp.ne.s32.totalorder %s162, %s165
      %p171 = scmp.eq.s32.totalorder %s22, 0
      %p172 = por %p170, %p171
      %p173 = scmp.ne.s32.totalorder %s162, %s165
      %p174 = scmp.eq.s32.totalorder %s27, 1
      %p175 = por %p173, %p174
      %p176 = scmp.ne.s32.totalorder %s165, %s166
      %p177 = scmp.eq.s32.totalorder %s27, 0
      %p178 = por %p176, %p177
      %p179 = scmp.ne.s32.totalorder %s165, %s166
      %p180 = scmp.eq.s32.totalorder %s28, 1
      %p181 = por %p179, %p180
      %p183 = scmp.ne.s32.totalorder %s166, %s182
      %p184 = scmp.eq.s32.totalorder %s28, 0
      %p185 = por %p183, %p184
      %s186 = ssub.s32 %s30, %s37
      %s187 = ssub.s32 %s29, %s41
      %s188 = sor.u32 %s186, %s187
      %p189 = scmp.eq.s32.totalorder %s188, 0
      %s191 = sadd.s32 %s190, 1
      %s192 = scalar_select %p189, %s190, %s191
      %p195 = pneg %p189
      %p196 = scmp.eq.s32.totalorder %s22, 1
      %p197 = por %p195, %p196
      %p198 = scmp.ne.s32.totalorder %s190, %s193
      %p199 = scmp.eq.s32.totalorder %s22, 0
      %p200 = por %p198, %p199
      %p201 = scmp.ne.s32.totalorder %s190, %s193
      %p202 = scmp.eq.s32.totalorder %s27, 1
      %p203 = por %p201, %p202
      %p204 = scmp.ne.s32.totalorder %s193, %s194
      %p205 = scmp.eq.s32.totalorder %s27, 0
      %p206 = por %p204, %p205
      %p207 = scmp.ne.s32.totalorder %s193, %s194
      %p208 = scmp.eq.s32.totalorder %s28, 1
      %p209 = por %p207, %p208
      %p211 = scmp.ne.s32.totalorder %s194, %s210
      %p212 = scmp.eq.s32.totalorder %s28, 0
      %p213 = por %p211, %p212
      %p214 = scmp.le.s32.totalorder 1, %s22
      %p215 = scmp.lt.s32.totalorder %s22, 3
      %p216 = pnand %p214, %p215
      %p217 = pneg %p216
      // Predicated region
      $region9: #{_rope_pallas.1} parent=5 // pred_check
        _
      $region10: #{_rope_pallas.1} parent=5 // pred_check_branch
        %219 = sbr.rel (%p216) target = $region12
      $region11: #{_rope_pallas.1} parent=5 // pred_region
        %s220 = ssub.s32 %s22, 1
        // Predicated region
        $region13: #{_rope_pallas.1} parent=11 // pred_check
          %p221 = pneg %p64
        $region14: #{_rope_pallas.1} parent=11 // pred_check_branch
          %223 = sbr.rel (%p221) target = $region16
        $region15: #{_rope_pallas.1} parent=11 // pred_region
          %s224 = sld [smem:[#allocation3]]
          %s225 = sadd.s32 %s224, %s31
          %s227 = ssub.s32 128, 128
          %228 = vsyncadd [#allocation5], %s227
          %s229 = smul.addr %s225, 128
          %s230 = scalar_lea.hbm %s1, %s229
          %s232 = sshll.u32 [#allocation4], 4
          %s233 = int_to_ptr.vmem [resolvable:$true] %s232
          %235 = dma.hbm_to_vmem [thread:$0]  %s230, 128, %s233, [#allocation5]
        $region16: #{_rope_pallas.1} parent=11 // pred_fallthru
          _
        // Predicated region
        $region17: #{_rope_pallas.1} parent=11 // pred_check
          %p236 = pneg %p94
        $region18: #{_rope_pallas.1} parent=11 // pred_check_branch
          %238 = sbr.rel (%p236) target = $region20
        $region19: #{_rope_pallas.1} parent=11 // pred_region
          %s239 = sld [smem:[#allocation3]]
          %s240 = sadd.s32 %s239, %s31
          %s242 = ssub.s32 128, 128
          %243 = vsyncadd [#allocation8], %s242
          %s244 = smul.addr %s240, 128
          %s245 = scalar_lea.hbm %s2, %s244
          %s247 = sshll.u32 [#allocation7], 4
          %s248 = int_to_ptr.vmem [resolvable:$true] %s247
          %250 = dma.hbm_to_vmem [thread:$0]  %s245, 128, %s248, [#allocation8]
        $region20: #{_rope_pallas.1} parent=11 // pred_fallthru
          _
      $region12: #{_rope_pallas.1} parent=5 // pred_fallthru
        _
      %p251 = scmp.lt.s32.totalorder %s22, 2
      // Predicated region
      $region21: #{_rope_pallas.1} parent=5 // pred_check
        %p252 = pneg %p251
      $region22: #{_rope_pallas.1} parent=5 // pred_check_branch
        %254 = sbr.rel (%p252) target = $region24
      $region23: #{_rope_pallas.1} parent=5 // pred_region
        // Predicated region
        $region25: #{_rope_pallas.1} parent=23 // pred_check
          %p255 = pneg %p116
        $region26: #{_rope_pallas.1} parent=23 // pred_check_branch
          %257 = sbr.rel (%p255) target = $region28
        $region27: #{_rope_pallas.1} parent=23 // pred_region
          %s258 = sand.u32 %s22, 1
          %s259 = scalar_lea.sflag [#allocation5], %s258
          %s260 = sand.u32 %s106, 1
          %s261 = smul.addr %s260, 8
          %s262 = scalar_lea.vmem [#allocation9], %s261
          %s264 = ssub.s32 128, 128
          %265 = vsyncadd %s259, %s264
          %s266 = sadd.s32 %s29, %s30
          %s267 = smul.addr %s266, 128
          %s268 = scalar_lea.hbm %s3, %s267
          %s270 = sshll.u32 %s262, 4
          %s271 = int_to_ptr.vmem [resolvable:$true] %s270
          %273 = dma.hbm_to_vmem [thread:$0]  %s268, 128, %s271, %s259
        $region28: #{_rope_pallas.1} parent=23 // pred_fallthru
          _
        // Predicated region
        $region29: #{_rope_pallas.1} parent=23 // pred_check
          %p274 = pneg %p144
        $region30: #{_rope_pallas.1} parent=23 // pred_check_branch
          %276 = sbr.rel (%p274) target = $region32
        $region31: #{_rope_pallas.1} parent=23 // pred_region
          %s277 = sand.u32 %s22, 1
          %s278 = scalar_lea.sflag [#allocation5], %s277
          %s279 = sand.u32 %s134, 1
          %s280 = smul.addr %s279, 8
          %s281 = scalar_lea.vmem [#allocation10], %s280
          %s283 = ssub.s32 128, 128
          %284 = vsyncadd %s278, %s283
          %s285 = sadd.s32 %s29, %s30
          %s286 = smul.addr %s285, 128
          %s287 = scalar_lea.hbm %s4, %s286
          %s289 = sshll.u32 %s281, 4
          %s290 = int_to_ptr.vmem [resolvable:$true] %s289
          %292 = dma.hbm_to_vmem [thread:$0]  %s287, 128, %s290, %s278
        $region32: #{_rope_pallas.1} parent=23 // pred_fallthru
          _
      $region24: #{_rope_pallas.1} parent=5 // pred_fallthru
        _
      %p293 = scmp.le.s32.totalorder 1, %s22
      %p294 = scmp.lt.s32.totalorder %s22, 3
      %p295 = pnand %p293, %p294
      %p296 = pneg %p295
      // Predicated region
      $region33: #{_rope_pallas.1} parent=5 // pred_check
        _
      $region34: #{_rope_pallas.1} parent=5 // pred_check_branch
        %298 = sbr.rel (%p295) target = $region36
      $region35: #{_rope_pallas.1} parent=5 // pred_region
        %s299 = ssub.s32 %s22, 1
        // Predicated region
        $region37: #{_rope_pallas.1} parent=35 // pred_check
          %p300 = pneg %p64
        $region38: #{_rope_pallas.1} parent=35 // pred_check_branch
          %302 = sbr.rel (%p300) target = $region40
        $region39: #{_rope_pallas.1} parent=35 // pred_region
          %303 = dma.done [#allocation5], 128
        $region40: #{_rope_pallas.1} parent=35 // pred_fallthru
          _
        // Predicated region
        $region41: #{_rope_pallas.1} parent=35 // pred_check
          %p304 = pneg %p94
        $region42: #{_rope_pallas.1} parent=35 // pred_check_branch
          %306 = sbr.rel (%p304) target = $region44
        $region43: #{_rope_pallas.1} parent=35 // pred_region
          %307 = dma.done [#allocation8], 128
        $region44: #{_rope_pallas.1} parent=35 // pred_fallthru
          _
        %s308 = sand.u32 %s27, 1
        %s309 = scalar_lea.sflag [#allocation5], %s308
        %s310 = sand.u32 %s109, 1
        %s311 = smul.addr %s310, 8
        %s312 = scalar_lea.vmem [#allocation9], %s311
        // Predicated region
        $region45: #{_rope_pallas.1} parent=35 // pred_check
          %p313 = pneg %p122
        $region46: #{_rope_pallas.1} parent=35 // pred_check_branch
          %315 = sbr.rel (%p313) target = $region48
        $region47: #{_rope_pallas.1} parent=35 // pred_region
          %316 = dma.done %s309, 128
        $region48: #{_rope_pallas.1} parent=35 // pred_fallthru
          _
        %s317 = sand.u32 %s27, 1
        %s318 = scalar_lea.sflag [#allocation5], %s317
        %s319 = sand.u32 %s137, 1
        %s320 = smul.addr %s319, 8
        %s321 = scalar_lea.vmem [#allocation10], %s320
        // Predicated region
        $region49: #{_rope_pallas.1} parent=35 // pred_check
          %p322 = pneg %p150
        $region50: #{_rope_pallas.1} parent=35 // pred_check_branch
          %324 = sbr.rel (%p322) target = $region52
        $region51: #{_rope_pallas.1} parent=35 // pred_region
          %325 = dma.done %s318, 128
        $region52: #{_rope_pallas.1} parent=35 // pred_fallthru
          _
        %p326 = pneg %p64
        %p327 = pneg %p61
        %p328 = pneg %p94
        %p329 = pneg %p91
        %s330 = sand.u32 %s27, 1
        %s331 = scalar_lea.sflag [#allocation5], %s330
        %s332 = sand.u32 %s109, 1
        %s333 = smul.addr %s332, 8
        %s334 = scalar_lea.vmem [#allocation9], %s333
        %p335 = pneg %p122
        %p336 = pneg %p119
        %s337 = sand.u32 %s27, 1
        %s338 = scalar_lea.sflag [#allocation5], %s337
        %s339 = sand.u32 %s137, 1
        %s340 = smul.addr %s339, 8
        %s341 = scalar_lea.vmem [#allocation10], %s340
        %p342 = pneg %p150
        %p343 = pneg %p147
        %p344 = pneg %p178
        %p345 = pneg %p175
        %s346 = sand.u32 %s165, 1
        %s347 = scalar_lea.sflag [#allocation6], %s346
        %s348 = sand.u32 %s165, 1
        %s349 = smul.addr %s348, 8
        %s350 = scalar_lea.vmem [#allocation11], %s349
        %p351 = pneg %p206
        %p352 = pneg %p203
        %s353 = sand.u32 %s193, 1
        %s354 = scalar_lea.sflag [#allocation13], %s353
        %s355 = sand.u32 %s193, 1
        %s356 = smul.addr %s355, 8
        %s357 = scalar_lea.vmem [#allocation12], %s356
        %s358 = sld [smem:[#allocation3]]
        %s359 = sadd.s32 %s358, %s31
        %s360 = sld [smem:[#allocation3]]
        %s361 = sadd.s32 %s360, %s31
        %v362 = vld [vmem:[#allocation4] sm:$0xff]
        %v363 = vld [vmem:[#allocation7] sm:$0xff]
        %v364 = vlaneseq
        %v365 = vand.u32 %v364, 127
        %vm366 = vcmp.lt.s32.totalorder %v365, 0
        %v367 = vsub.s32 0, %v365
        %v368 = vsel %vm366, %v367, %v365
        %v369 = vshrl.u32 %v368, 1
        %v370 = vand.u32 %v368, 1
        %v371 = vsub.s32 0, %v370
        %v372 = vsel %vm366, %v371, %v370
        %vm373 = vcmp.ne.s32.totalorder %v372, 0
        %vm374 = vcmp.lt.s32.totalorder %v372, 0
        %vm375 = vmand %vm374, %vm373
        %v376 = vadd.s32 %v372, 2
        %v377 = vsel %vm375, %v376, %v372
        %vm378 = vcmp.eq.s32.totalorder %v377, 0
        %v379 = vld [vmem:[%s312] sm:$0xff]
        %380 = vrot.lane.b32.xlu0 %v379, 127
        %v381 = vpop.permute.xlu0 %380
        %382 = vrot.lane.b32.xlu0 %v379, 1
        %v383 = vpop.permute.xlu0 %382
        %v384 = vsel %vm378, 1, 0
        %vm385 = vcmp.eq.s32.totalorder %v384, 1
        %v386 = vsel %vm385, %v381, %v383
        %v387 = vmul.f32 %v379, %v362
        %v388 = vmul.f32 %v386, %v363
        %v389 = vadd.f32 %v387, %v388
        %390 = vst [vmem:[%s350] sm:$0xff] %v389
        %v391 = vld [vmem:[%s321] sm:$0xff]
        %392 = vrot.lane.b32.xlu0 %v391, 127
        %v393 = vpop.permute.xlu0 %392
        %394 = vrot.lane.b32.xlu0 %v391, 1
        %v395 = vpop.permute.xlu0 %394
        %v396 = vsel %vm385, %v393, %v395
        %v397 = vmul.f32 %v391, %v362
        %v398 = vmul.f32 %v396, %v363
        %v399 = vadd.f32 %v397, %v398
        %400 = vst [vmem:[%s357] sm:$0xff] %v399
        %s401 = sand.u32 %s165, 1
        %s402 = scalar_lea.sflag [#allocation6], %s401
        %s403 = sand.u32 %s165, 1
        %s404 = smul.addr %s403, 8
        %s405 = scalar_lea.vmem [#allocation11], %s404
        %s406 = sand.u32 %s193, 1
        %s407 = scalar_lea.sflag [#allocation13], %s406
        %s408 = sand.u32 %s193, 1
        %s409 = smul.addr %s408, 8
        %s410 = scalar_lea.vmem [#allocation12], %s409
        // Predicated region
        $region53: #{_rope_pallas.1} parent=35 // pred_check
          %p411 = pneg %p175
        $region54: #{_rope_pallas.1} parent=35 // pred_check_branch
          %413 = sbr.rel (%p411) target = $region56
        $region55: #{_rope_pallas.1} parent=35 // pred_region
          %s415 = ssub.s32 128, 128
          %416 = vsyncadd %s402, %s415
          %s417 = sadd.s32 %s31, %s32
          %s418 = smul.addr %s417, 128
          %s419 = scalar_lea.hbm %s5, %s418
          %s421 = sshll.u32 %s405, 4
          %s422 = int_to_ptr.vmem [resolvable:$true] %s421
          %424 = dma.vmem_to_hbm [thread:$0]  %s422, 128, %s419, %s402
        $region56: #{_rope_pallas.1} parent=35 // pred_fallthru
          _
        // Predicated region
        $region57: #{_rope_pallas.1} parent=35 // pred_check
          %p425 = pneg %p203
        $region58: #{_rope_pallas.1} parent=35 // pred_check_branch
          %427 = sbr.rel (%p425) target = $region60
        $region59: #{_rope_pallas.1} parent=35 // pred_region
          %s429 = ssub.s32 128, 128
          %430 = vsyncadd %s407, %s429
          %s431 = sadd.s32 %s31, %s32
          %s432 = smul.addr %s431, 128
          %s433 = scalar_lea.hbm %s6, %s432
          %s435 = sshll.u32 %s410, 4
          %s436 = int_to_ptr.vmem [resolvable:$true] %s435
          %438 = dma.vmem_to_hbm [thread:$0]  %s436, 128, %s433, %s407
        $region60: #{_rope_pallas.1} parent=35 // pred_fallthru
          _
      $region36: #{_rope_pallas.1} parent=5 // pred_fallthru
        _
      %p439 = scmp.le.s32.totalorder 2, %s22
      // Predicated region
      $region61: #{_rope_pallas.1} parent=5 // pred_check
        %p440 = pneg %p439
      $region62: #{_rope_pallas.1} parent=5 // pred_check_branch
        %442 = sbr.rel (%p440) target = $region64
      $region63: #{_rope_pallas.1} parent=5 // pred_region
        %s443 = ssub.s32 %s22, 2
        // Predicated region
        $region65: #{_rope_pallas.1} parent=63 // pred_check
          %p444 = pneg %p181
        $region66: #{_rope_pallas.1} parent=63 // pred_check_branch
          %446 = sbr.rel (%p444) target = $region68
        $region67: #{_rope_pallas.1} parent=63 // pred_region
          %s447 = sand.u32 %s166, 1
          %s448 = scalar_lea.sflag [#allocation6], %s447
          %s449 = sand.u32 %s166, 1
          %s450 = smul.addr %s449, 8
          %s451 = scalar_lea.vmem [#allocation11], %s450
          %452 = dma.done %s448, 128
        $region68: #{_rope_pallas.1} parent=63 // pred_fallthru
          _
        // Predicated region
        $region69: #{_rope_pallas.1} parent=63 // pred_check
          %p453 = pneg %p209
        $region70: #{_rope_pallas.1} parent=63 // pred_check_branch
          %455 = sbr.rel (%p453) target = $region72
        $region71: #{_rope_pallas.1} parent=63 // pred_region
          %s456 = sand.u32 %s194, 1
          %s457 = scalar_lea.sflag [#allocation13], %s456
          %s458 = sand.u32 %s194, 1
          %s459 = smul.addr %s458, 8
          %s460 = scalar_lea.vmem [#allocation12], %s459
          %461 = dma.done %s457, 128
        $region72: #{_rope_pallas.1} parent=63 // pred_fallthru
          _
      $region64: #{_rope_pallas.1} parent=5 // pred_fallthru
        _
    $region6: #{_rope_pallas.1} parent=1 // loop_footer
      %s26 = sadd.s32 1, %s22
    $region7: #{_rope_pallas.1} parent=1 // loop_footer_branch
      %21 = sbr.rel target = $region3
    $region8: #{_rope_pallas.1} parent=1 // loop_exit
      _
    %462 = vsyncpa [#allocation5], 1
    %s463 = scalar_lea.sflag [#allocation5], 1
    %464 = vsyncpa %s463, 1
    %465 = vsyncpa [#allocation8], 1
    %466 = vsyncpa [#allocation6], 1
    %s467 = scalar_lea.sflag [#allocation6], 1
    %468 = vsyncpa %s467, 1
    %469 = vsyncpa [#allocation13], 1
    %s470 = scalar_lea.sflag [#allocation13], 1
    %471 = vsyncpa %s470, 1

</llo_original>
